<compile_context>
chip_gen: v7x
topology: tpu7x:2x2x1
jax: 0.10.0
libtpu: 0.0.40
codegen_flags: <defaults>
</compile_context>

<pallas_src>
import jax
import jax.numpy as jnp
from jax.experimental import pallas as pl
from jax.experimental.pallas import tpu as pltpu

LANE = 128            # lane width: pad output feature dim to a multiple of this
DEFAULT_TILE_B = 512  # batch rows per grid step (fits easily in v7x's 64 MiB VMEM)


def mlp_kernel(x_ref, w1_ref, b1_ref, w2_ref, b2_ref, o_ref):
    # x:  [TB, S]      bf16   (activations, lane = features)
    # w1: [S, H]       bf16   (VMEM-resident across all grid steps)
    # b1: [1, H]       f32
    # w2: [H, A_pad]   bf16   (A_pad = 128-lane-dense)
    # b2: [1, A_pad]   f32
    # o:  [TB, A_pad]  f32
    h = jnp.dot(x_ref[...], w1_ref[...],
                preferred_element_type=jnp.float32)          # MXU, f32 accum
    h = jnp.maximum(h + b1_ref[...], 0.0)                    # bias + ReLU in f32 (VPU)
    out = jnp.dot(h.astype(jnp.bfloat16), w2_ref[...],
                  preferred_element_type=jnp.float32)        # MXU, f32 accum
    o_ref[...] = out + b2_ref[...]                           # lane-dense f32 store


def cross_entropy_agent_forward(x, w1, b1, w2, b2, *, tile_b=DEFAULT_TILE_B):
    """x: [B, state_dim] f32; w1: [state_dim, 64]; w2: [64, action_n].
    Returns logits [B, action_n] f32."""
    B, state_dim = x.shape
    hidden = w1.shape[1]
    action_n = w2.shape[1]

    # ---- wrapper-side layout plumbing (zero extra in-kernel math) ----------
    # Lane-dense output: zero-pad action_n -> multiple of 128.
    a_pad = max(LANE, ((action_n + LANE - 1) // LANE) * LANE)
    w2p = jnp.zeros((hidden, a_pad), jnp.float32).at[:, :action_n].set(
        w2.astype(jnp.float32))
    b2p = jnp.zeros((1, a_pad), jnp.float32).at[:, :action_n].set(
        b2.reshape(1, action_n).astype(jnp.float32))
    b1p = b1.reshape(1, hidden).astype(jnp.float32)

    # bf16 MXU inputs (accumulation stays f32 inside the kernel).
    xb = x.astype(jnp.bfloat16)
    w1b = w1.astype(jnp.bfloat16)
    w2b = w2p.astype(jnp.bfloat16)

    # Batch tiling: round the tile to a sublane-friendly size and pad the
    # batch so the grid divides evenly (padded rows are sliced off below).
    tb = min(tile_b, max(8, ((B + 7) // 8) * 8))
    b_pad = ((B + tb - 1) // tb) * tb
    if b_pad != B:
        xb = jnp.zeros((b_pad, state_dim), jnp.bfloat16).at[:B].set(xb)
    grid = (b_pad // tb,)

    out = pl.pallas_call(
        mlp_kernel,
        out_shape=jax.ShapeDtypeStruct((b_pad, a_pad), jnp.float32),
        grid_spec=pltpu.PrefetchScalarGridSpec(
            num_scalar_prefetch=0,
            grid=grid,
            in_specs=[
                pl.BlockSpec((tb, state_dim), lambda i: (i, 0)),   # x tile
                pl.BlockSpec((state_dim, hidden), lambda i: (0, 0)),  # w1 (resident)
                pl.BlockSpec((1, hidden), lambda i: (0, 0)),          # b1 (resident)
                pl.BlockSpec((hidden, a_pad), lambda i: (0, 0)),      # w2 (resident)
                pl.BlockSpec((1, a_pad), lambda i: (0, 0)),           # b2 (resident)
            ],
            out_specs=pl.BlockSpec((tb, a_pad), lambda i: (i, 0)),
        ),
        compiler_params=pltpu.CompilerParams(
            dimension_semantics=("parallel",)),
    )(xb, w1b, b1p, w2b, b2p)

    return out[:B, :action_n]


def init_params(key, state_dim, hidden, action_n):
    """Deterministic init mimicking nn.Linear's uniform(-1/sqrt(fan_in), ...)."""
    k1, k2, k3, k4 = jax.random.split(key, 4)
    bound1 = 1.0 / jnp.sqrt(state_dim)
    bound2 = 1.0 / jnp.sqrt(hidden)
    w1 = jax.random.uniform(k1, (state_dim, hidden), jnp.float32, -bound1, bound1)
    b1 = jax.random.uniform(k2, (1, hidden), jnp.float32, -bound1, bound1)
    w2 = jax.random.uniform(k3, (hidden, action_n), jnp.float32, -bound2, bound2)
    b2 = jax.random.uniform(k4, (1, action_n), jnp.float32, -bound2, bound2)
    return w1, b1, w2, b2


def _reference(x, w1, b1, w2, b2):
    """Pure-JAX reference mimicking the kernel's bf16-input / f32-accum math."""
    f32 = jnp.float32
    xb = x.astype(jnp.bfloat16).astype(f32)
    w1b = w1.astype(jnp.bfloat16).astype(f32)
    w2b = w2.astype(jnp.bfloat16).astype(f32)
    h = jnp.maximum(xb @ w1b + b1.reshape(1, -1), 0.0)
    hb = h.astype(jnp.bfloat16).astype(f32)
    return hb @ w2b + b2.reshape(1, -1)


if __name__ == "__main__":
    # Acrobot-v1: state_dim=6, action_n=3.
    STATE_DIM, HIDDEN, ACTION_N = 6, 64, 3

    key = jax.random.PRNGKey(0)
    k_x, k_x2, k_p = jax.random.split(key, 3)
    w1, b1, w2, b2 = init_params(k_p, STATE_DIM, HIDDEN, ACTION_N)

    # --- small batch (single grid step) ---
    B_small = 8
    x_small = jax.random.normal(k_x, (B_small, STATE_DIM), dtype=jnp.float32)
    logits = jax.block_until_ready(
        cross_entropy_agent_forward(x_small, w1, b1, w2, b2))
    ref = _reference(x_small, w1, b1, w2, b2)
    assert logits.shape == (B_small, ACTION_N)
    assert jnp.allclose(logits, ref, atol=1e-3, rtol=1e-3)

    # --- larger CEM-style rollout batch (multiple grid steps + batch padding) ---
    B_big = 1200  # not a multiple of the 512-row tile, exercises padding path
    x_big = jax.random.normal(k_x2, (B_big, STATE_DIM), dtype=jnp.float32)
    logits_big = jax.block_until_ready(
        cross_entropy_agent_forward(x_big, w1, b1, w2, b2))
    ref_big = _reference(x_big, w1, b1, w2, b2)
    assert logits_big.shape == (B_big, ACTION_N)
    assert jnp.allclose(logits_big, ref_big, atol=1e-3, rtol=1e-3)

    print("KERNEL_OK")
</pallas_src>

<mosaic_0001>
module attributes {stable_mosaic.version = 11 : i64} {
  func.func @mlp_kernel(%arg0: i32, %arg1: memref<8x6xbf16, #tpu.memory_space<vmem>>, %arg2: memref<6x64xbf16, #tpu.memory_space<vmem>>, %arg3: memref<1x64xf32, #tpu.memory_space<vmem>>, %arg4: memref<64x128xbf16, #tpu.memory_space<vmem>>, %arg5: memref<1x128xf32, #tpu.memory_space<vmem>>, %arg6: memref<8x128xf32, #tpu.memory_space<vmem>>) attributes {dimension_semantics = [#tpu.dimension_semantics<parallel>], iteration_bounds = array<i64: 1>, scalar_prefetch = 0 : i64, scratch_operands = 0 : i64, tpu.core_type = #tpu.core_type<tc>, window_params = [{transform_indices = @transform_0, window_bounds = array<i64: 8, 6>}, {pipeline_mode = #tpu.pipeline_mode<synchronous>, transform_indices = @transform_1, window_bounds = array<i64: 6, 64>}, {pipeline_mode = #tpu.pipeline_mode<synchronous>, transform_indices = @transform_2, window_bounds = array<i64: 1, 64>}, {pipeline_mode = #tpu.pipeline_mode<synchronous>, transform_indices = @transform_3, window_bounds = array<i64: 64, 128>}, {pipeline_mode = #tpu.pipeline_mode<synchronous>, transform_indices = @transform_4, window_bounds = array<i64: 1, 128>}, {transform_indices = @transform_5, window_bounds = array<i64: 8, 128>}]} {
    %c0 = arith.constant 0 : index
    %c0_0 = arith.constant 0 : index
    %0 = vector.load %arg1[%c0, %c0_0] : memref<8x6xbf16, #tpu.memory_space<vmem>>, vector<8x6xbf16>
    %c0_1 = arith.constant 0 : index
    %c0_2 = arith.constant 0 : index
    %1 = vector.load %arg2[%c0_1, %c0_2] : memref<6x64xbf16, #tpu.memory_space<vmem>>, vector<6x64xbf16>
    %cst = arith.constant dense<0.000000e+00> : vector<8x64xf32>
    %2 = tpu.matmul %0, %1, %cst {dimension_numbers = #tpu.dot_dimension_numbers<[1], [0], [0], [1], [0, 0, 1, 1], [], []>} : vector<8x6xbf16>, vector<6x64xbf16>, vector<8x64xf32> -> vector<8x64xf32>
    %c0_3 = arith.constant 0 : index
    %c0_4 = arith.constant 0 : index
    %3 = vector.load %arg3[%c0_3, %c0_4] : memref<1x64xf32, #tpu.memory_space<vmem>>, vector<1x64xf32>
    %4 = vector.broadcast %3 : vector<1x64xf32> to vector<8x64xf32>
    %5 = arith.addf %2, %4 : vector<8x64xf32>
    %cst_5 = arith.constant 0.000000e+00 : f32
    %6 = vector.broadcast %cst_5 : f32 to vector<8x64xf32>
    %7 = arith.maximumf %5, %6 : vector<8x64xf32>
    %8 = arith.truncf %7 : vector<8x64xf32> to vector<8x64xbf16>
    %c0_6 = arith.constant 0 : index
    %c0_7 = arith.constant 0 : index
    %9 = vector.load %arg4[%c0_6, %c0_7] : memref<64x128xbf16, #tpu.memory_space<vmem>>, vector<64x128xbf16>
    %cst_8 = arith.constant dense<0.000000e+00> : vector<8x128xf32>
    %10 = tpu.matmul %8, %9, %cst_8 {dimension_numbers = #tpu.dot_dimension_numbers<[1], [0], [0], [1], [0, 0, 1, 1], [], []>} : vector<8x64xbf16>, vector<64x128xbf16>, vector<8x128xf32> -> vector<8x128xf32>
    %c0_9 = arith.constant 0 : index
    %c0_10 = arith.constant 0 : index
    %11 = vector.load %arg5[%c0_9, %c0_10] : memref<1x128xf32, #tpu.memory_space<vmem>>, vector<1x128xf32>
    %12 = vector.broadcast %11 : vector<1x128xf32> to vector<8x128xf32>
    %13 = arith.addf %10, %12 : vector<8x128xf32>
    %c0_11 = arith.constant 0 : index
    %c0_12 = arith.constant 0 : index
    %14 = vector.load %arg6[%c0_11, %c0_12] : memref<8x128xf32, #tpu.memory_space<vmem>>, vector<8x128xf32>
    tpu.vector_store %arg6[%c0_11, %c0_12], %13 {strides = array<i32>} : memref<8x128xf32, #tpu.memory_space<vmem>>, vector<8x128xf32>,
    return
  }
  func.func @transform_0(%arg0: i32) -> (i32, i32) {
    %c0_i32 = arith.constant 0 : i32
    %c0_i32_0 = arith.constant 0 : i32
    return %arg0, %c0_i32 : i32, i32
  }
  func.func @transform_1(%arg0: i32) -> (i32, i32) {
    %c0_i32 = arith.constant 0 : i32
    %c0_i32_0 = arith.constant 0 : i32
    %c0_i32_1 = arith.constant 0 : i32
    return %c0_i32, %c0_i32_0 : i32, i32
  }
  func.func @transform_2(%arg0: i32) -> (i32, i32) {
    %c0_i32 = arith.constant 0 : i32
    %c0_i32_0 = arith.constant 0 : i32
    %c0_i32_1 = arith.constant 0 : i32
    return %c0_i32, %c0_i32_0 : i32, i32
  }
  func.func @transform_3(%arg0: i32) -> (i32, i32) {
    %c0_i32 = arith.constant 0 : i32
    %c0_i32_0 = arith.constant 0 : i32
    %c0_i32_1 = arith.constant 0 : i32
    return %c0_i32, %c0_i32_0 : i32, i32
  }
  func.func @transform_4(%arg0: i32) -> (i32, i32) {
    %c0_i32 = arith.constant 0 : i32
    %c0_i32_0 = arith.constant 0 : i32
    %c0_i32_1 = arith.constant 0 : i32
    return %c0_i32, %c0_i32_0 : i32, i32
  }
  func.func @transform_5(%arg0: i32) -> (i32, i32) {
    %c0_i32 = arith.constant 0 : i32
    %c0_i32_0 = arith.constant 0 : i32
    return %arg0, %c0_i32 : i32, i32
  }
}

</mosaic_0001>

<llo_original>
// kernel: tpu_custom_call.1
$region0: #{tpu_custom_call.1}
  #allocation0 [shape = 'u32[]', space=smem, size = 0x4, offset = 0x4, fixed_abs, tag = 'smem constant byte address 0x4 - core index']
  #allocation1 [shape = 'u32[144,128]{1,0:T(1,128)}', space=vmem, size = 0x12000, scoped, tag = 'internal scratch']
  %s0 = inlined_call_operand.hbm [shape: bf16[8,6], index: 0, kind: input, shape index: {}]
  %s1 = inlined_call_operand.hbm [shape: bf16[6,64], index: 1, kind: input, shape index: {}]
  %s2 = inlined_call_operand.vmem [shape: f32[1,64], index: 2, kind: input, shape index: {}]
  %s3 = inlined_call_operand.hbm [shape: bf16[64,128], index: 3, kind: input, shape index: {}]
  %s4 = inlined_call_operand.vmem [shape: f32[1,128], index: 4, kind: input, shape index: {}]
  %s5 = inlined_call_operand.hbm [shape: f32[8,128], index: 5, kind: output, shape index: {}]
  %s6 = sld [smem:[#allocation0]]
  $region42: #{tpu_custom_call.1} parent=0
    _
  %s8 = ssub.s32 1, %s6
  %s9 = scalar_select 0, %s8, %s6
  $region1: #{tpu_custom_call.1} parent=0
    #allocation2 [shape = 'u8[2048]{0}', space=vmem, size = 0x800, scoped, tag = 'input window, operand 0, single buffered']
    #allocation3 [shape = 's32[1]{0}', space=sflag, size = 0x4, scoped, tag = 'scoped memory for tpu_custom_call.1']
    #allocation4 [shape = 's32[1]{0}', space=sflag, size = 0x4, scoped, tag = 'scoped memory for tpu_custom_call.1']
    #allocation5 [shape = 'u8[2048]{0}', space=vmem, size = 0x800, scoped, tag = 'input window, operand 1, single buffered']
    #allocation6 [shape = 's32[1]{0}', space=sflag, size = 0x4, scoped, tag = 'scoped memory for tpu_custom_call.1']
    #allocation7 [shape = 'u8[16384]{0}', space=vmem, size = 0x4000, scoped, tag = 'input window, operand 3, single buffered']
    #allocation8 [shape = 'u8[4096]{0}', space=vmem, size = 0x1000, scoped, tag = 'output window, operand 0, single buffered']
    %10 = vsyncpa [#allocation3], 0
    %11 = vsyncpa [#allocation6], 0
    %12 = vsyncpa [#allocation4], 0
    // Predicated region
    $region2: #{tpu_custom_call.1} parent=1 // pred_check
      _
    $region3: #{tpu_custom_call.1} parent=1 // pred_check_branch
      %14 = sbr.rel (0) target = $region5
    $region4: #{tpu_custom_call.1} parent=1 // pred_region
      %s16 = ssub.s32 64, 64
      %17 = vsyncadd [#allocation3], %s16
      %s19 = sshll.u32 [#allocation2], 4
      %s20 = int_to_ptr.vmem [resolvable:$true] %s19
      %22 = dma.hbm_to_vmem [thread:$0]  %s0, 64, %s20, [#allocation3]
    $region5: #{tpu_custom_call.1} parent=1 // pred_fallthru
      _
    // Predicated region
    $region6: #{tpu_custom_call.1} parent=1 // pred_check
      _
    $region7: #{tpu_custom_call.1} parent=1 // pred_check_branch
      %24 = sbr.rel (0) target = $region9
    $region8: #{tpu_custom_call.1} parent=1 // pred_region
      %s26 = ssub.s32 64, 64
      %27 = vsyncadd [#allocation6], %s26
      %s29 = sshll.u32 [#allocation5], 4
      %s30 = int_to_ptr.vmem [resolvable:$true] %s29
      %32 = dma.hbm_to_vmem [thread:$0]  %s1, 64, %s30, [#allocation6]
    $region9: #{tpu_custom_call.1} parent=1 // pred_fallthru
      _
    // Predicated region
    $region10: #{tpu_custom_call.1} parent=1 // pred_check
      _
    $region11: #{tpu_custom_call.1} parent=1 // pred_check_branch
      %34 = sbr.rel (0) target = $region13
    $region12: #{tpu_custom_call.1} parent=1 // pred_region
      _
    $region13: #{tpu_custom_call.1} parent=1 // pred_fallthru
      _
    // Predicated region
    $region14: #{tpu_custom_call.1} parent=1 // pred_check
      _
    $region15: #{tpu_custom_call.1} parent=1 // pred_check_branch
      %36 = sbr.rel (0) target = $region17
    $region16: #{tpu_custom_call.1} parent=1 // pred_region
      %s38 = ssub.s32 512, 512
      %39 = vsyncadd [#allocation6], %s38
      %s40 = sshll.u32 [#allocation7], 4
      %s41 = int_to_ptr.vmem [resolvable:$true] %s40
      %46 = dma.hbm_to_vmem [thread:$0]  %s3, 512, %s41, [#allocation6], 64, 64, 4
    $region17: #{tpu_custom_call.1} parent=1 // pred_fallthru
      _
    // Predicated region
    $region18: #{tpu_custom_call.1} parent=1 // pred_check
      _
    $region19: #{tpu_custom_call.1} parent=1 // pred_check_branch
      %48 = sbr.rel (0) target = $region21
    $region20: #{tpu_custom_call.1} parent=1 // pred_region
      _
    $region21: #{tpu_custom_call.1} parent=1 // pred_fallthru
      _
    // Predicated region
    $region22: #{tpu_custom_call.1} parent=1 // pred_check
      _
    $region23: #{tpu_custom_call.1} parent=1 // pred_check_branch
      %50 = sbr.rel (0) target = $region25
    $region24: #{tpu_custom_call.1} parent=1 // pred_region
      %51 = dma.done [#allocation3], 64
    $region25: #{tpu_custom_call.1} parent=1 // pred_fallthru
      _
    // Predicated region
    $region26: #{tpu_custom_call.1} parent=1 // pred_check
      _
    $region27: #{tpu_custom_call.1} parent=1 // pred_check_branch
      %53 = sbr.rel (0) target = $region29
    $region28: #{tpu_custom_call.1} parent=1 // pred_region
      %54 = dma.done [#allocation6], 64
    $region29: #{tpu_custom_call.1} parent=1 // pred_fallthru
      _
    // Predicated region
    $region30: #{tpu_custom_call.1} parent=1 // pred_check
      _
    $region31: #{tpu_custom_call.1} parent=1 // pred_check_branch
      %56 = sbr.rel (0) target = $region33
    $region32: #{tpu_custom_call.1} parent=1 // pred_region
      %57 = dma.done [#allocation6], 512
    $region33: #{tpu_custom_call.1} parent=1 // pred_fallthru
      _
    %v59 = vld [vmem:[#allocation2] sm:$0xf]
    %v60 = vld [vmem:[#allocation5] sm:$0x7]
    %v61 = vld [vmem:[%s2] sm:$0x1]
    %v63 = vlaneseq
    %v64 = vshrl.u32 %v63, 7
    %v65 = vsub.s32 0, %v64
    %v66 = vrot.slane %v61, %v65
    %vm68 = vcmask 48128
    %v70 = vsel %vm68, %v59, 0
    %vm72 = vcmask 1042432
    %v74 = vsel %vm72, %v60, 0
    %76 = vmatprep.subr.bf16.mxu0 0
    %77 = vmatpush1.bf16.msra.mxu0 %v74
    %78 = vmatprep.subr.bf16.mxu0 0
    %79 = vmatpush1.bf16.msra.mxu0 0
    %80 = vmatprep.subr.bf16.mxu0 0
    %81 = vmatpush1.bf16.msra.mxu0 0
    %82 = vmatprep.subr.bf16.mxu0 0
    %83 = vmatpush1.bf16.msra.mxu0 0
    %84 = vmatprep.subr.bf16.mxu0 0
    %85 = vmatpush1.bf16.msra.mxu0 0
    %86 = vmatprep.subr.bf16.mxu0 0
    %87 = vmatpush1.bf16.msra.mxu0 0
    %88 = vmatprep.subr.bf16.mxu0 0
    %89 = vmatpush1.bf16.msra.mxu0 0
    %90 = vmatprep.subr.bf16.mxu0 0
    %91 = vmatpush1.bf16.msra.mxu0 0
    %92 = vmatprep.subr.bf16.mxu0 0
    %93 = vmatpush1.bf16.msra.mxu0 0
    %94 = vmatprep.subr.bf16.mxu0 0
    %95 = vmatpush1.bf16.msra.mxu0 0
    %96 = vmatprep.subr.bf16.mxu0 0
    %97 = vmatpush1.bf16.msra.mxu0 0
    %98 = vmatprep.subr.bf16.mxu0 0
    %99 = vmatpush1.bf16.msra.mxu0 0
    %100 = vmatprep.subr.bf16.mxu0 0
    %101 = vmatpush1.bf16.msra.mxu0 0
    %102 = vmatprep.subr.bf16.mxu0 0
    %103 = vmatpush1.bf16.msra.mxu0 0
    %104 = vmatprep.subr.bf16.mxu0 0
    %105 = vmatpush1.bf16.msra.mxu0 0
    %106 = vmatprep.subr.bf16.mxu0 0
    %107 = vmatpush1.bf16.msra.mxu0 0
    %108 = vmatprep.mubr.bf16.mxu0 0
    %109 = vmatmul.mubr.bf16.gmra.mrb[0].mxu0 %v70
    %v110 = vpop.f32.mrb[0].mxu0
    %v111 = vadd.f32 %v66, %v110
    %v112 = vpop.f32.mrb[0].mxu0
    %v113 = vpop.f32.mrb[0].mxu0
    %v114 = vpop.f32.mrb[0].mxu0
    %115 = vdwg.mxu0
    %v116 = vmax.f32 %v111, 0.0
    %v117 = vpack.c.bf16 %v116, %v116
    %v118 = vld [vmem:[#allocation7] sm:$0xf]
    %v119 = vld [vmem:[#allocation7 + $0x4] sm:$0xf]
    %v120 = vld [vmem:[#allocation7 + $0x8] sm:$0xf]
    %v121 = vld [vmem:[#allocation7 + $0xc] sm:$0xf]
    %v122 = vld [vmem:[#allocation7 + $0x10] sm:$0xf]
    %v123 = vld [vmem:[#allocation7 + $0x14] sm:$0xf]
    %v124 = vld [vmem:[#allocation7 + $0x18] sm:$0xf]
    %v125 = vld [vmem:[#allocation7 + $0x1c] sm:$0xf]
    %v126 = vld [vmem:[%s4] sm:$0x1]
    %v128 = vlaneseq
    %v129 = vshrl.u32 %v128, 7
    %v130 = vsub.s32 0, %v129
    %v131 = vrot.slane %v126, %v130
    %v141 = vunpack.c.l.b16 %v118
    %v142 = vunpack.c.l.b16 %v119
    %v143 = vunpack.c.l.b16 %v120
    %v144 = vunpack.c.l.b16 %v121
    %v145 = vunpack.c.l.b16 %v122
    %v146 = vunpack.c.l.b16 %v123
    %v147 = vunpack.c.l.b16 %v124
    %v148 = vunpack.c.l.b16 %v125
    %v149 = vpack.c.b16 %v142, %v141
    %v150 = vpack.c.b16 %v144, %v143
    %v151 = vpack.c.b16 %v146, %v145
    %v152 = vpack.c.b16 %v148, %v147
    %vm157 = vcmask 523264
    %v159 = vsel %vm157, %v117, 0
    %161 = vmatprep.subr.bf16.mxu0 0
    %162 = vmatpush1.bf16.msra.mxu0 %v149
    %163 = vmatprep.subr.bf16.mxu0 0
    %164 = vmatpush1.bf16.msra.mxu0 %v150
    %165 = vmatprep.subr.bf16.mxu0 0
    %166 = vmatpush1.bf16.msra.mxu0 %v151
    %167 = vmatprep.subr.bf16.mxu0 0
    %168 = vmatpush1.bf16.msra.mxu0 %v152
    %169 = vmatprep.subr.bf16.mxu0 0
    %170 = vmatpush1.bf16.msra.mxu0 0
    %171 = vmatprep.subr.bf16.mxu0 0
    %172 = vmatpush1.bf16.msra.mxu0 0
    %173 = vmatprep.subr.bf16.mxu0 0
    %174 = vmatpush1.bf16.msra.mxu0 0
    %175 = vmatprep.subr.bf16.mxu0 0
    %176 = vmatpush1.bf16.msra.mxu0 0
    %177 = vmatprep.subr.bf16.mxu0 0
    %178 = vmatpush1.bf16.msra.mxu0 0
    %179 = vmatprep.subr.bf16.mxu0 0
    %180 = vmatpush1.bf16.msra.mxu0 0
    %181 = vmatprep.subr.bf16.mxu0 0
    %182 = vmatpush1.bf16.msra.mxu0 0
    %183 = vmatprep.subr.bf16.mxu0 0
    %184 = vmatpush1.bf16.msra.mxu0 0
    %185 = vmatprep.subr.bf16.mxu0 0
    %186 = vmatpush1.bf16.msra.mxu0 0
    %187 = vmatprep.subr.bf16.mxu0 0
    %188 = vmatpush1.bf16.msra.mxu0 0
    %189 = vmatprep.subr.bf16.mxu0 0
    %190 = vmatpush1.bf16.msra.mxu0 0
    %191 = vmatprep.subr.bf16.mxu0 0
    %192 = vmatpush1.bf16.msra.mxu0 0
    %193 = vmatprep.mubr.bf16.mxu0 0
    %194 = vmatmul.mubr.bf16.gmra.mrb[0].mxu0 %v159
    %v195 = vpop.f32.mrb[0].mxu0
    %v196 = vadd.f32 %v131, %v195
    %v197 = vpop.f32.mrb[0].mxu0
    %v198 = vpop.f32.mrb[0].mxu0
    %v199 = vpop.f32.mrb[0].mxu0
    %200 = vdwg.mxu0
    %201 = vst [vmem:[#allocation8] sm:$0xff] %v196
    // Predicated region
    $region34: #{tpu_custom_call.1} parent=1 // pred_check
      _
    $region35: #{tpu_custom_call.1} parent=1 // pred_check_branch
      %203 = sbr.rel (0) target = $region37
    $region36: #{tpu_custom_call.1} parent=1 // pred_region
      %s205 = ssub.s32 128, 128
      %206 = vsyncadd [#allocation4], %s205
      %s208 = sshll.u32 [#allocation8], 4
      %s209 = int_to_ptr.vmem [resolvable:$true] %s208
      %211 = dma.vmem_to_hbm [thread:$0]  %s209, 128, %s5, [#allocation4]
    $region37: #{tpu_custom_call.1} parent=1 // pred_fallthru
      _
    // Predicated region
    $region38: #{tpu_custom_call.1} parent=1 // pred_check
      _
    $region39: #{tpu_custom_call.1} parent=1 // pred_check_branch
      %213 = sbr.rel (0) target = $region41
    $region40: #{tpu_custom_call.1} parent=1 // pred_region
      %214 = dma.done [#allocation4], 128
    $region41: #{tpu_custom_call.1} parent=1 // pred_fallthru
      _
    %215 = vsyncpa [#allocation3], 1
    %216 = vsyncpa [#allocation6], 1
    %217 = vsyncpa [#allocation4], 1

</llo_original>
